<compile_context>
chip_gen: v7x
topology: tpu7x:2x2x1
jax: 0.10.0
libtpu: 0.0.40
codegen_flags: <defaults>
</compile_context>

<pallas_src>
import functools

import jax
import jax.numpy as jnp
from jax.experimental import pallas as pl
from jax.experimental.pallas import tpu as pltpu


def _projection_kernel(q_ref, wrel_ref, brel_ref, head_ref, tail_ref,
                       wfh_ref, wfr_ref, wft_ref, bfin_ref, out_ref):
    """Hoisted small dense path, run once for the whole batch:
       relation = question_emb @ W_rel + b_rel
       output   = [head | relation | tail] @ W_fin + b_fin   (split-weight form)
    Output stored in bf16 so the scoring kernel feeds the MXU bf16 x bf16 -> f32."""
    relation = (jnp.dot(q_ref[...], wrel_ref[...],
                        preferred_element_type=jnp.float32) + brel_ref[...])
    out = (jnp.dot(head_ref[...], wfh_ref[...], preferred_element_type=jnp.float32)
           + jnp.dot(relation, wfr_ref[...], preferred_element_type=jnp.float32)
           + jnp.dot(tail_ref[...], wft_ref[...], preferred_element_type=jnp.float32)
           + bfin_ref[...])
    out_ref[...] = out.astype(out_ref.dtype)


def _score_ce_kernel(times_ref, ans_ref,            # scalar-prefetch operands (SMEM)
                     out_ref, right_ref,            # inputs (VMEM tiles)
                     scores_ref, nll_ref,           # outputs
                     m_sc, l_sc, p_sc,              # VMEM scratch accumulators
                     *, e1_actual, te1):
    """Per (batch row b, entity tile e):
         scores[b, e*TE1:(e+1)*TE1] = output[b] . right_tile^T
       plus an online logsumexp / picked-logit accumulation giving the per-row
       CrossEntropy NLL at the last entity tile."""
    b = pl.program_id(0)
    e = pl.program_id(1)

    @pl.when(e == 0)
    def _init():
        m_sc[...] = jnp.full_like(m_sc, -jnp.inf)
        l_sc[...] = jnp.zeros_like(l_sc)
        p_sc[...] = jnp.zeros_like(p_sc)

    out_row = out_ref[0]            # (1, D_pad)    bf16
    right = right_ref[0]            # (TE1, D_pad)  bf16

    # Lane-dense (1, TE1) result; contraction over the last dims (q @ k.T pattern).
    s = jax.lax.dot_general(out_row, right,
                            dimension_numbers=(((1,), (1,)), ((), ())),
                            preferred_element_type=jnp.float32)     # (1, TE1) f32

    # Mask padded entity columns (global column index >= true E1) to -inf.
    col = jax.lax.broadcasted_iota(jnp.int32, s.shape, 1) + e * te1
    valid = col < e1_actual
    s_masked = jnp.where(valid, s, -jnp.inf)
    scores_ref[...] = s_masked.reshape(scores_ref.shape)

    # Online logsumexp accumulation.
    tile_max = jnp.max(s_masked, axis=-1, keepdims=True)            # (1, 1)
    m_new = jnp.maximum(m_sc[...], tile_max)
    l_sc[...] = (l_sc[...] * jnp.exp(m_sc[...] - m_new)
                 + jnp.sum(jnp.exp(s_masked - m_new), axis=-1, keepdims=True))
    m_sc[...] = m_new

    # Picked logit (score at the answer index), accumulated across tiles.
    ans = ans_ref[b]
    hit = jnp.logical_and(col == ans, valid)
    p_sc[...] += jnp.sum(jnp.where(hit, s, 0.0), axis=-1, keepdims=True)

    @pl.when(e == pl.num_programs(1) - 1)
    def _finalize():
        nll = m_sc[...] + jnp.log(l_sc[...]) - p_sc[...]            # (1, 1)
        nll_ref[...] = nll.reshape(nll_ref.shape)


def _round_up(x, m):
    return (x + m - 1) // m * m


@jax.jit
def qa_bert_tango_forward(question_emb, heads, tails, times, answers,
                          tango_weights, W_rel, b_rel, W_fin, b_fin):
    """Glue: embedding gathers, (8,128) padding, bf16 cast; then two pallas_calls."""
    B, _ = question_emb.shape
    T, E1, D = tango_weights.shape

    D_pad = _round_up(D, 128)
    # Entity (lane) tile: multiple of 128; bump the cap per-generation VMEM if desired.
    te1 = min(2048, _round_up(E1, 128))
    E1_pad = _round_up(E1, te1)
    n_e = E1_pad // te1
    pad_d = D_pad - D

    # --- glue: gathers + zero-padding of the small dense parameters -----------------
    head_emb = jnp.pad(tango_weights[times, heads], ((0, 0), (0, pad_d)))   # (B, D_pad)
    tail_emb = jnp.pad(tango_weights[times, tails], ((0, 0), (0, pad_d)))   # (B, D_pad)
    wrel = jnp.pad(W_rel, ((0, 0), (0, pad_d)))                              # (H, D_pad)
    brel = jnp.pad(b_rel, (0, pad_d)).reshape(1, D_pad)
    wfh = jnp.pad(W_fin[:D], ((0, pad_d), (0, pad_d)))                       # (D_pad, D_pad)
    wfr = jnp.pad(W_fin[D:2 * D], ((0, pad_d), (0, pad_d)))
    wft = jnp.pad(W_fin[2 * D:], ((0, pad_d), (0, pad_d)))
    bfin = jnp.pad(b_fin, (0, pad_d)).reshape(1, D_pad)

    # bf16 candidate table padded to (T, E1_pad, D_pad) for the tiled HBM DMA.
    # TODO(synk): in a real deployment pre-pad / pre-cast this table once, offline.
    tango_bf16 = jnp.pad(
        tango_weights, ((0, 0), (0, E1_pad - E1), (0, pad_d))).astype(jnp.bfloat16)

    times_i32 = times.astype(jnp.int32)
    answers_i32 = answers.astype(jnp.int32)

    # --- kernel 1: hoisted dense projection (runs once, tiny) -----------------------
    vmem = pl.BlockSpec(memory_space=pltpu.MemorySpace.VMEM)
    out_rows = pl.pallas_call(
        _projection_kernel,
        out_shape=jax.ShapeDtypeStruct((B, D_pad), jnp.bfloat16),
        in_specs=[vmem] * 9,
        out_specs=vmem,
    )(question_emb, wrel, brel, head_emb, tail_emb, wfh, wfr, wft, bfin)
    out_rows = out_rows.reshape(B, 1, D_pad)

    # --- kernel 2: tiled scoring + fused online CrossEntropy ------------------------
    grid_spec = pltpu.PrefetchScalarGridSpec(
        num_scalar_prefetch=2,                     # times, answers -> SMEM
        grid=(B, n_e),                             # batch parallel, E1 reduction last
        in_specs=[
            pl.BlockSpec((1, 1, D_pad), lambda b, e, t, a: (b, 0, 0)),        # output row
            pl.BlockSpec((1, te1, D_pad), lambda b, e, t, a: (t[b], e, 0)),   # right tile
        ],
        out_specs=[
            pl.BlockSpec((1, 1, te1), lambda b, e, t, a: (b, 0, e)),          # scores
            pl.BlockSpec((1, 1, 1), lambda b, e, t, a: (b, 0, 0)),            # per-row NLL
        ],
        scratch_shapes=[pltpu.VMEM((1, 1), jnp.float32)] * 3,                 # m, l, picked
    )
    scores_pad, nll = pl.pallas_call(
        functools.partial(_score_ce_kernel, e1_actual=E1, te1=te1),
        out_shape=(jax.ShapeDtypeStruct((B, 1, E1_pad), jnp.float32),
                   jax.ShapeDtypeStruct((B, 1, 1), jnp.float32)),
        grid_spec=grid_spec,
        compiler_params=pltpu.CompilerParams(
            dimension_semantics=("parallel", "arbitrary"),
            vmem_limit_bytes=32 * 1024 * 1024),
    )(times_i32, answers_i32, out_rows, tango_bf16)

    scores = scores_pad[:, 0, :E1]                 # (B, E1)
    loss = jnp.mean(nll[:, 0, 0])                  # CrossEntropyLoss(reduction='mean')

    # Matches torch return: (None, scores_ep, scores_yn, scores_mc, loss)
    return None, scores, None, None, loss


def _reference(question_emb, heads, tails, times, answers,
               tango_weights, W_rel, b_rel, W_fin, b_fin):
    """Pure-JAX reference of the entity_prediction branch (f32)."""
    relation = question_emb @ W_rel + b_rel
    head_emb = tango_weights[times, heads]
    tail_emb = tango_weights[times, tails]
    output = jnp.concatenate([head_emb, relation, tail_emb], axis=-1) @ W_fin + b_fin
    right = tango_weights[times]
    scores = jnp.einsum('bd,bed->be', output, right)
    lse = jax.scipy.special.logsumexp(scores, axis=-1)
    picked = jnp.take_along_axis(scores, answers[:, None], axis=-1)[:, 0]
    loss = jnp.mean(lse - picked)
    return scores, loss


if __name__ == "__main__":
    # Small stand-in shapes (consistent with the module, scaled down):
    #   H_LM stands in for the 768-dim LM hidden, D for tkg_embedding_dim,
    #   T = number of tango timestamps, E1 = num_entities + 1.
    B, H_LM, D, T, NUM_ENT = 8, 64, 32, 4, 127
    E1 = NUM_ENT + 1

    key = jax.random.PRNGKey(0)
    keys = jax.random.split(key, 10)

    # Deterministic synthetic parameters (shapes from __init__).
    tango_weights = 0.1 * jax.random.normal(keys[0], (T, E1, D), jnp.float32)
    W_rel = 0.05 * jax.random.normal(keys[1], (H_LM, D), jnp.float32)   # linear_relation
    b_rel = 0.05 * jax.random.normal(keys[2], (D,), jnp.float32)
    W_fin = 0.05 * jax.random.normal(keys[3], (3 * D, D), jnp.float32)  # final_linear
    b_fin = 0.05 * jax.random.normal(keys[4], (D,), jnp.float32)

    # Deterministic synthetic inputs.
    question_emb = jax.random.normal(keys[5], (B, H_LM), jnp.float32)   # stands in for LM [CLS]
    heads = jax.random.randint(keys[6], (B,), 0, NUM_ENT, jnp.int32)
    tails = jax.random.randint(keys[7], (B,), 0, NUM_ENT, jnp.int32)
    times = jax.random.randint(keys[8], (B,), 0, T, jnp.int32)
    answers = jax.random.randint(keys[9], (B,), 0, E1, jnp.int32)

    _, scores_ep, _, _, loss = qa_bert_tango_forward(
        question_emb, heads, tails, times, answers,
        tango_weights, W_rel, b_rel, W_fin, b_fin)
    jax.block_until_ready((scores_ep, loss))

    ref_scores, ref_loss = _reference(
        question_emb, heads, tails, times, answers,
        tango_weights, W_rel, b_rel, W_fin, b_fin)

    assert scores_ep.shape == (B, E1) and scores_ep.dtype == jnp.float32
    assert loss.shape == () and bool(jnp.isfinite(loss))
    # bf16 candidate table + bf16 output rows -> loose tolerance.
    assert bool(jnp.allclose(scores_ep, ref_scores, rtol=2e-2, atol=2e-2)), "scores mismatch"
    assert bool(jnp.allclose(loss, ref_loss, rtol=2e-2, atol=2e-2)), "loss mismatch"
    print("KERNEL_OK")
</pallas_src>

<mosaic_0001>
module attributes {stable_mosaic.version = 11 : i64} {
  func.func @_score_ce_kernel(%arg0: i32, %arg1: i32, %arg2: memref<8xi32, #tpu.memory_space<smem>>, %arg3: memref<8xi32, #tpu.memory_space<smem>>, %arg4: memref<1x1x128xbf16, #tpu.memory_space<vmem>>, %arg5: memref<1x128x128xbf16, #tpu.memory_space<vmem>>, %arg6: memref<1x1x128xf32, #tpu.memory_space<vmem>>, %arg7: memref<1x1x1xf32, #tpu.memory_space<vmem>>, %arg8: memref<1x1xf32, #tpu.memory_space<vmem>>, %arg9: memref<1x1xf32, #tpu.memory_space<vmem>>, %arg10: memref<1x1xf32, #tpu.memory_space<vmem>>) attributes {dimension_semantics = [#tpu.dimension_semantics<parallel>, #tpu.dimension_semantics<arbitrary>], iteration_bounds = array<i64: 8, 1>, scalar_prefetch = 2 : i64, scratch_operands = 3 : i64, tpu.core_type = #tpu.core_type<tc>, window_params = [{transform_indices = @transform_0, window_bounds = array<i64: 1, 1, 128>}, {transform_indices = @transform_1, window_bounds = array<i64: 1, 128, 128>}, {transform_indices = @transform_2, window_bounds = array<i64: 1, 1, 128>}, {transform_indices = @transform_3, window_bounds = array<i64: 1, 1, 1>}]} {
    %c0_i32 = arith.constant 0 : i32
    %0 = arith.cmpi eq, %arg1, %c0_i32 : i32
    %1 = arith.extui %0 : i1 to i32
    %c0_i32_0 = arith.constant 0 : i32
    %2 = arith.cmpi ne, %1, %c0_i32_0 : i32
    scf.if %2 {
      %cst_31 = arith.constant 0xFF800000 : f32
      %50 = vector.broadcast %cst_31 : f32 to vector<1x1xf32>
      %c0_32 = arith.constant 0 : index
      %c0_33 = arith.constant 0 : index
      %51 = vector.load %arg8[%c0_32, %c0_33] : memref<1x1xf32, #tpu.memory_space<vmem>>, vector<1x1xf32>
      tpu.vector_store %arg8[%c0_32, %c0_33], %50 {strides = array<i32>} : memref<1x1xf32, #tpu.memory_space<vmem>>, vector<1x1xf32>,
      %cst_34 = arith.constant 0.000000e+00 : f32
      %52 = vector.broadcast %cst_34 : f32 to vector<1x1xf32>
      %c0_35 = arith.constant 0 : index
      %c0_36 = arith.constant 0 : index
      %53 = vector.load %arg9[%c0_35, %c0_36] : memref<1x1xf32, #tpu.memory_space<vmem>>, vector<1x1xf32>
      tpu.vector_store %arg9[%c0_35, %c0_36], %52 {strides = array<i32>} : memref<1x1xf32, #tpu.memory_space<vmem>>, vector<1x1xf32>,
      %cst_37 = arith.constant 0.000000e+00 : f32
      %54 = vector.broadcast %cst_37 : f32 to vector<1x1xf32>
      %c0_38 = arith.constant 0 : index
      %c0_39 = arith.constant 0 : index
      %55 = vector.load %arg10[%c0_38, %c0_39] : memref<1x1xf32, #tpu.memory_space<vmem>>, vector<1x1xf32>
      tpu.vector_store %arg10[%c0_38, %c0_39], %54 {strides = array<i32>} : memref<1x1xf32, #tpu.memory_space<vmem>>, vector<1x1xf32>,
    } else {
    }
    %c0 = arith.constant 0 : index
    %c0_1 = arith.constant 0 : index
    %c0_2 = arith.constant 0 : index
    %3 = vector.load %arg4[%c0, %c0_1, %c0_2] : memref<1x1x128xbf16, #tpu.memory_space<vmem>>, vector<1x1x128xbf16>
    %4 = vector.shape_cast %3 : vector<1x1x128xbf16> to vector<1x128xbf16>
    %c0_3 = arith.constant 0 : index
    %c0_4 = arith.constant 0 : index
    %c0_5 = arith.constant 0 : index
    %5 = vector.load %arg5[%c0_3, %c0_4, %c0_5] : memref<1x128x128xbf16, #tpu.memory_space<vmem>>, vector<1x128x128xbf16>
    %6 = vector.shape_cast %5 : vector<1x128x128xbf16> to vector<128x128xbf16>
    %cst = arith.constant dense<0.000000e+00> : vector<1x128xf32>
    %7 = tpu.matmul %4, %6, %cst {dimension_numbers = #tpu.dot_dimension_numbers<[1], [1], [0], [0], [0, 0, 1, 0], [], []>} : vector<1x128xbf16>, vector<128x128xbf16>, vector<1x128xf32> -> vector<1x128xf32>
    %8 = tpu.iota {dimensions = array<i32: 1>} : vector<1x128xi32>
    %c128_i32 = arith.constant 128 : i32
    %9 = arith.muli %arg1, %c128_i32 : i32
    %10 = vector.broadcast %9 : i32 to vector<1x128xi32>
    %11 = arith.addi %8, %10 : vector<1x128xi32>
    %c128_i32_6 = arith.constant 128 : i32
    %12 = vector.broadcast %c128_i32_6 : i32 to vector<1x128xi32>
    %13 = arith.cmpi slt, %11, %12 : vector<1x128xi32>
    %cst_7 = arith.constant 0xFF800000 : f32
    %14 = vector.broadcast %cst_7 : f32 to vector<1x128xf32>
    %15 = arith.select %13, %7, %14 : vector<1x128xi1>, vector<1x128xf32>
    %16 = vector.shape_cast %15 : vector<1x128xf32> to vector<1x1x128xf32>
    %c0_8 = arith.constant 0 : index
    %c0_9 = arith.constant 0 : index
    %c0_10 = arith.constant 0 : index
    %17 = vector.load %arg6[%c0_8, %c0_9, %c0_10] : memref<1x1x128xf32, #tpu.memory_space<vmem>>, vector<1x1x128xf32>
    tpu.vector_store %arg6[%c0_8, %c0_9, %c0_10], %16 {strides = array<i32>} : memref<1x1x128xf32, #tpu.memory_space<vmem>>, vector<1x1x128xf32>,
    %cst_11 = arith.constant dense<0xFF800000> : vector<1xf32>
    %18 = vector.multi_reduction <maximumf>, %15, %cst_11 [1] : vector<1x128xf32> to vector<1xf32>
    %19 = vector.shape_cast %18 : vector<1xf32> to vector<1x1xf32>
    %c0_12 = arith.constant 0 : index
    %c0_13 = arith.constant 0 : index
    %20 = vector.load %arg8[%c0_12, %c0_13] : memref<1x1xf32, #tpu.memory_space<vmem>>, vector<1x1xf32>
    %21 = arith.maximumf %20, %19 : vector<1x1xf32>
    %c0_14 = arith.constant 0 : index
    %c0_15 = arith.constant 0 : index
    %22 = vector.load %arg9[%c0_14, %c0_15] : memref<1x1xf32, #tpu.memory_space<vmem>>, vector<1x1xf32>
    %c0_16 = arith.constant 0 : index
    %c0_17 = arith.constant 0 : index
    %23 = vector.load %arg8[%c0_16, %c0_17] : memref<1x1xf32, #tpu.memory_space<vmem>>, vector<1x1xf32>
    %24 = arith.subf %23, %21 : vector<1x1xf32>
    %25 = math.exp %24 : vector<1x1xf32>
    %26 = arith.mulf %22, %25 : vector<1x1xf32>
    %27 = vector.broadcast %21 : vector<1x1xf32> to vector<1x128xf32>
    %28 = arith.subf %15, %27 : vector<1x128xf32>
    %29 = math.exp %28 : vector<1x128xf32>
    %cst_18 = arith.constant dense<0.000000e+00> : vector<1xf32>
    %30 = vector.multi_reduction <add>, %29, %cst_18 [1] : vector<1x128xf32> to vector<1xf32>
    %31 = vector.shape_cast %30 : vector<1xf32> to vector<1x1xf32>
    %32 = arith.addf %26, %31 : vector<1x1xf32>
    %c0_19 = arith.constant 0 : index
    %c0_20 = arith.constant 0 : index
    %33 = vector.load %arg9[%c0_19, %c0_20] : memref<1x1xf32, #tpu.memory_space<vmem>>, vector<1x1xf32>
    tpu.vector_store %arg9[%c0_19, %c0_20], %32 {strides = array<i32>} : memref<1x1xf32, #tpu.memory_space<vmem>>, vector<1x1xf32>,
    %c0_21 = arith.constant 0 : index
    %c0_22 = arith.constant 0 : index
    %34 = vector.load %arg8[%c0_21, %c0_22] : memref<1x1xf32, #tpu.memory_space<vmem>>, vector<1x1xf32>
    tpu.vector_store %arg8[%c0_21, %c0_22], %21 {strides = array<i32>} : memref<1x1xf32, #tpu.memory_space<vmem>>, vector<1x1xf32>,
    %35 = arith.index_cast %arg0 : i32 to index
    %36 = memref.load %arg3[%35] : memref<8xi32, #tpu.memory_space<smem>>
    %37 = vector.broadcast %36 : i32 to vector<1x128xi32>
    %38 = arith.cmpi eq, %11, %37 : vector<1x128xi32>
    %39 = arith.andi %38, %13 : vector<1x128xi1>
    %c0_23 = arith.constant 0 : index
    %c0_24 = arith.constant 0 : index
    %40 = vector.load %arg10[%c0_23, %c0_24] : memref<1x1xf32, #tpu.memory_space<vmem>>, vector<1x1xf32>
    %cst_25 = arith.constant 0.000000e+00 : f32
    %41 = vector.broadcast %cst_25 : f32 to vector<1x128xf32>
    %42 = arith.select %39, %7, %41 : vector<1x128xi1>, vector<1x128xf32>
    %cst_26 = arith.constant dense<0.000000e+00> : vector<1xf32>
    %43 = vector.multi_reduction <add>, %42, %cst_26 [1] : vector<1x128xf32> to vector<1xf32>
    %44 = vector.shape_cast %43 : vector<1xf32> to vector<1x1xf32>
    %45 = arith.addf %40, %44 : vector<1x1xf32>
    %c0_27 = arith.constant 0 : index
    %c0_28 = arith.constant 0 : index
    %46 = vector.load %arg10[%c0_27, %c0_28] : memref<1x1xf32, #tpu.memory_space<vmem>>, vector<1x1xf32>
    tpu.vector_store %arg10[%c0_27, %c0_28], %45 {strides = array<i32>} : memref<1x1xf32, #tpu.memory_space<vmem>>, vector<1x1xf32>,
    %c0_i32_29 = arith.constant 0 : i32
    %47 = arith.cmpi eq, %arg1, %c0_i32_29 : i32
    %48 = arith.extui %47 : i1 to i32
    %c0_i32_30 = arith.constant 0 : i32
    %49 = arith.cmpi ne, %48, %c0_i32_30 : i32
    scf.if %49 {
      %c0_31 = arith.constant 0 : index
      %c0_32 = arith.constant 0 : index
      %50 = vector.load %arg8[%c0_31, %c0_32] : memref<1x1xf32, #tpu.memory_space<vmem>>, vector<1x1xf32>
      %c0_33 = arith.constant 0 : index
      %c0_34 = arith.constant 0 : index
      %51 = vector.load %arg9[%c0_33, %c0_34] : memref<1x1xf32, #tpu.memory_space<vmem>>, vector<1x1xf32>
      %52 = math.log %51 : vector<1x1xf32>
      %53 = arith.addf %50, %52 : vector<1x1xf32>
      %c0_35 = arith.constant 0 : index
      %c0_36 = arith.constant 0 : index
      %54 = vector.load %arg10[%c0_35, %c0_36] : memref<1x1xf32, #tpu.memory_space<vmem>>, vector<1x1xf32>
      %55 = arith.subf %53, %54 : vector<1x1xf32>
      %56 = vector.shape_cast %55 : vector<1x1xf32> to vector<1x1x1xf32>
      %c0_37 = arith.constant 0 : index
      %c0_38 = arith.constant 0 : index
      %c0_39 = arith.constant 0 : index
      %57 = vector.load %arg7[%c0_37, %c0_38, %c0_39] : memref<1x1x1xf32, #tpu.memory_space<vmem>>, vector<1x1x1xf32>
      tpu.vector_store %arg7[%c0_37, %c0_38, %c0_39], %56 {strides = array<i32>} : memref<1x1x1xf32, #tpu.memory_space<vmem>>, vector<1x1x1xf32>,
    } else {
    }
    return
  }
  func.func @transform_0(%arg0: i32, %arg1: i32, %arg2: memref<8xi32, #tpu.memory_space<smem>>, %arg3: memref<8xi32, #tpu.memory_space<smem>>) -> (i32, i32, i32) {
    %c0_i32 = arith.constant 0 : i32
    %c0_i32_0 = arith.constant 0 : i32
    %c0_i32_1 = arith.constant 0 : i32
    return %arg0, %c0_i32, %c0_i32_0 : i32, i32, i32
  }
  func.func @transform_1(%arg0: i32, %arg1: i32, %arg2: memref<8xi32, #tpu.memory_space<smem>>, %arg3: memref<8xi32, #tpu.memory_space<smem>>) -> (i32, i32, i32) {
    %0 = arith.index_cast %arg0 : i32 to index
    %1 = memref.load %arg2[%0] : memref<8xi32, #tpu.memory_space<smem>>
    %c0_i32 = arith.constant 0 : i32
    %c0_i32_0 = arith.constant 0 : i32
    return %1, %arg1, %c0_i32 : i32, i32, i32
  }
  func.func @transform_2(%arg0: i32, %arg1: i32, %arg2: memref<8xi32, #tpu.memory_space<smem>>, %arg3: memref<8xi32, #tpu.memory_space<smem>>) -> (i32, i32, i32) {
    %c0_i32 = arith.constant 0 : i32
    %c0_i32_0 = arith.constant 0 : i32
    return %arg0, %c0_i32, %arg1 : i32, i32, i32
  }
  func.func @transform_3(%arg0: i32, %arg1: i32, %arg2: memref<8xi32, #tpu.memory_space<smem>>, %arg3: memref<8xi32, #tpu.memory_space<smem>>) -> (i32, i32, i32) {
    %c0_i32 = arith.constant 0 : i32
    %c0_i32_0 = arith.constant 0 : i32
    %c0_i32_1 = arith.constant 0 : i32
    return %arg0, %c0_i32, %c0_i32_0 : i32, i32, i32
  }
}

module attributes {stable_mosaic.version = 11 : i64} {
  func.func @_projection_kernel(%arg0: memref<8x64xf32, #tpu.memory_space<vmem>>, %arg1: memref<64x128xf32, #tpu.memory_space<vmem>>, %arg2: memref<1x128xf32, #tpu.memory_space<vmem>>, %arg3: memref<8x128xf32, #tpu.memory_space<vmem>>, %arg4: memref<8x128xf32, #tpu.memory_space<vmem>>, %arg5: memref<128x128xf32, #tpu.memory_space<vmem>>, %arg6: memref<128x128xf32, #tpu.memory_space<vmem>>, %arg7: memref<128x128xf32, #tpu.memory_space<vmem>>, %arg8: memref<1x128xf32, #tpu.memory_space<vmem>>, %arg9: memref<8x128xbf16, #tpu.memory_space<vmem>>) attributes {dimension_semantics = [], scalar_prefetch = 0 : i64, scratch_operands = 0 : i64, tpu.core_type = #tpu.core_type<tc>} {
    %c0 = arith.constant 0 : index
    %c0_0 = arith.constant 0 : index
    %0 = vector.load %arg0[%c0, %c0_0] : memref<8x64xf32, #tpu.memory_space<vmem>>, vector<8x64xf32>
    %c0_1 = arith.constant 0 : index
    %c0_2 = arith.constant 0 : index
    %1 = vector.load %arg1[%c0_1, %c0_2] : memref<64x128xf32, #tpu.memory_space<vmem>>, vector<64x128xf32>
    %cst = arith.constant dense<0.000000e+00> : vector<8x128xf32>
    %2 = tpu.matmul %0, %1, %cst {dimension_numbers = #tpu.dot_dimension_numbers<[1], [0], [0], [1], [0, 0, 1, 1], [], []>} : vector<8x64xf32>, vector<64x128xf32>, vector<8x128xf32> -> vector<8x128xf32>
    %c0_3 = arith.constant 0 : index
    %c0_4 = arith.constant 0 : index
    %3 = vector.load %arg2[%c0_3, %c0_4] : memref<1x128xf32, #tpu.memory_space<vmem>>, vector<1x128xf32>
    %4 = vector.broadcast %3 : vector<1x128xf32> to vector<8x128xf32>
    %5 = arith.addf %2, %4 : vector<8x128xf32>
    %c0_5 = arith.constant 0 : index
    %c0_6 = arith.constant 0 : index
    %6 = vector.load %arg3[%c0_5, %c0_6] : memref<8x128xf32, #tpu.memory_space<vmem>>, vector<8x128xf32>
    %c0_7 = arith.constant 0 : index
    %c0_8 = arith.constant 0 : index
    %7 = vector.load %arg5[%c0_7, %c0_8] : memref<128x128xf32, #tpu.memory_space<vmem>>, vector<128x128xf32>
    %cst_9 = arith.constant dense<0.000000e+00> : vector<8x128xf32>
    %8 = tpu.matmul %6, %7, %cst_9 {dimension_numbers = #tpu.dot_dimension_numbers<[1], [0], [0], [1], [0, 0, 1, 1], [], []>} : vector<8x128xf32>, vector<128x128xf32>, vector<8x128xf32> -> vector<8x128xf32>
    %c0_10 = arith.constant 0 : index
    %c0_11 = arith.constant 0 : index
    %9 = vector.load %arg6[%c0_10, %c0_11] : memref<128x128xf32, #tpu.memory_space<vmem>>, vector<128x128xf32>
    %cst_12 = arith.constant dense<0.000000e+00> : vector<8x128xf32>
    %10 = tpu.matmul %5, %9, %cst_12 {dimension_numbers = #tpu.dot_dimension_numbers<[1], [0], [0], [1], [0, 0, 1, 1], [], []>} : vector<8x128xf32>, vector<128x128xf32>, vector<8x128xf32> -> vector<8x128xf32>
    %11 = arith.addf %8, %10 : vector<8x128xf32>
    %c0_13 = arith.constant 0 : index
    %c0_14 = arith.constant 0 : index
    %12 = vector.load %arg4[%c0_13, %c0_14] : memref<8x128xf32, #tpu.memory_space<vmem>>, vector<8x128xf32>
    %c0_15 = arith.constant 0 : index
    %c0_16 = arith.constant 0 : index
    %13 = vector.load %arg7[%c0_15, %c0_16] : memref<128x128xf32, #tpu.memory_space<vmem>>, vector<128x128xf32>
    %cst_17 = arith.constant dense<0.000000e+00> : vector<8x128xf32>
    %14 = tpu.matmul %12, %13, %cst_17 {dimension_numbers = #tpu.dot_dimension_numbers<[1], [0], [0], [1], [0, 0, 1, 1], [], []>} : vector<8x128xf32>, vector<128x128xf32>, vector<8x128xf32> -> vector<8x128xf32>
    %15 = arith.addf %11, %14 : vector<8x128xf32>
    %c0_18 = arith.constant 0 : index
    %c0_19 = arith.constant 0 : index
    %16 = vector.load %arg8[%c0_18, %c0_19] : memref<1x128xf32, #tpu.memory_space<vmem>>, vector<1x128xf32>
    %17 = vector.broadcast %16 : vector<1x128xf32> to vector<8x128xf32>
    %18 = arith.addf %15, %17 : vector<8x128xf32>
    %19 = arith.truncf %18 : vector<8x128xf32> to vector<8x128xbf16>
    %c0_20 = arith.constant 0 : index
    %c0_21 = arith.constant 0 : index
    %20 = vector.load %arg9[%c0_20, %c0_21] : memref<8x128xbf16, #tpu.memory_space<vmem>>, vector<8x128xbf16>
    tpu.vector_store %arg9[%c0_20, %c0_21], %19 {strides = array<i32>} : memref<8x128xbf16, #tpu.memory_space<vmem>>, vector<8x128xbf16>,
    return
  }
}

</mosaic_0001>

<llo_original>
// kernel: qa_bert_tango_forward.2
$region0: #{qa_bert_tango_forward.2}
  #allocation0 [shape = 'u32[]', space=smem, size = 0x4, offset = 0x4, fixed_abs, tag = 'smem constant byte address 0x4 - core index']
  #allocation1 [shape = 'u32[144,128]{1,0:T(1,128)}', space=vmem, size = 0x12000, scoped, tag = 'internal scratch']
  %s0 = inlined_call_operand.vmem [shape: f32[8,64], index: 0, kind: input, shape index: {}]
  %s1 = inlined_call_operand.vmem [shape: f32[64,128], index: 1, kind: input, shape index: {}]
  %s2 = inlined_call_operand.vmem [shape: f32[1,128], index: 2, kind: input, shape index: {}]
  %s3 = inlined_call_operand.vmem [shape: f32[8,128], index: 3, kind: input, shape index: {}]
  %s4 = inlined_call_operand.vmem [shape: f32[8,128], index: 4, kind: input, shape index: {}]
  %s5 = inlined_call_operand.vmem [shape: f32[128,128], index: 5, kind: input, shape index: {}]
  %s6 = inlined_call_operand.vmem [shape: f32[128,128], index: 6, kind: input, shape index: {}]
  %s7 = inlined_call_operand.vmem [shape: f32[128,128], index: 7, kind: input, shape index: {}]
  %s8 = inlined_call_operand.vmem [shape: f32[1,128], index: 8, kind: input, shape index: {}]
  %s9 = inlined_call_operand.vmem [shape: bf16[8,128], index: 9, kind: output, shape index: {}]
  %s10 = sld [smem:[#allocation0]]
  $region46: #{qa_bert_tango_forward.2} parent=0
    _
  %s12 = ssub.s32 1, %s10
  %s13 = scalar_select 0, %s12, %s10
  // Predicated region
  $region2: #{qa_bert_tango_forward.2} parent=0 // pred_check
    _
  $region3: #{qa_bert_tango_forward.2} parent=0 // pred_check_branch
    %15 = sbr.rel (0) target = $region5
  $region4: #{qa_bert_tango_forward.2} parent=0 // pred_region
    _
  $region5: #{qa_bert_tango_forward.2} parent=0 // pred_fallthru
    _
  // Predicated region
  $region6: #{qa_bert_tango_forward.2} parent=0 // pred_check
    _
  $region7: #{qa_bert_tango_forward.2} parent=0 // pred_check_branch
    %17 = sbr.rel (0) target = $region9
  $region8: #{qa_bert_tango_forward.2} parent=0 // pred_region
    _
  $region9: #{qa_bert_tango_forward.2} parent=0 // pred_fallthru
    _
  // Predicated region
  $region10: #{qa_bert_tango_forward.2} parent=0 // pred_check
    _
  $region11: #{qa_bert_tango_forward.2} parent=0 // pred_check_branch
    %19 = sbr.rel (0) target = $region13
  $region12: #{qa_bert_tango_forward.2} parent=0 // pred_region
    _
  $region13: #{qa_bert_tango_forward.2} parent=0 // pred_fallthru
    _
  // Predicated region
  $region14: #{qa_bert_tango_forward.2} parent=0 // pred_check
    _
  $region15: #{qa_bert_tango_forward.2} parent=0 // pred_check_branch
    %21 = sbr.rel (0) target = $region17
  $region16: #{qa_bert_tango_forward.2} parent=0 // pred_region
    _
  $region17: #{qa_bert_tango_forward.2} parent=0 // pred_fallthru
    _
  // Predicated region
  $region18: #{qa_bert_tango_forward.2} parent=0 // pred_check
    _
  $region19: #{qa_bert_tango_forward.2} parent=0 // pred_check_branch
    %23 = sbr.rel (0) target = $region21
  $region20: #{qa_bert_tango_forward.2} parent=0 // pred_region
    _
  $region21: #{qa_bert_tango_forward.2} parent=0 // pred_fallthru
    _
  // Predicated region
  $region22: #{qa_bert_tango_forward.2} parent=0 // pred_check
    _
  $region23: #{qa_bert_tango_forward.2} parent=0 // pred_check_branch
    %25 = sbr.rel (0) target = $region25
  $region24: #{qa_bert_tango_forward.2} parent=0 // pred_region
    _
  $region25: #{qa_bert_tango_forward.2} parent=0 // pred_fallthru
    _
  // Predicated region
  $region26: #{qa_bert_tango_forward.2} parent=0 // pred_check
    _
  $region27: #{qa_bert_tango_forward.2} parent=0 // pred_check_branch
    %27 = sbr.rel (0) target = $region29
  $region28: #{qa_bert_tango_forward.2} parent=0 // pred_region
    _
  $region29: #{qa_bert_tango_forward.2} parent=0 // pred_fallthru
    _
  // Predicated region
  $region30: #{qa_bert_tango_forward.2} parent=0 // pred_check
    _
  $region31: #{qa_bert_tango_forward.2} parent=0 // pred_check_branch
    %29 = sbr.rel (0) target = $region33
  $region32: #{qa_bert_tango_forward.2} parent=0 // pred_region
    _
  $region33: #{qa_bert_tango_forward.2} parent=0 // pred_fallthru
    _
  // Predicated region
  $region34: #{qa_bert_tango_forward.2} parent=0 // pred_check
    _
  $region35: #{qa_bert_tango_forward.2} parent=0 // pred_check_branch
    %31 = sbr.rel (0) target = $region37
  $region36: #{qa_bert_tango_forward.2} parent=0 // pred_region
    _
  $region37: #{qa_bert_tango_forward.2} parent=0 // pred_fallthru
    _
  %v32 = vld [vmem:[%s0] sm:$0xff]
  %v33 = vld [vmem:[%s1] sm:$0xff]
  %v34 = vld [vmem:[%s1 + $0x8] sm:$0xff]
  %v35 = vld [vmem:[%s1 + $0x10] sm:$0xff]
  %v36 = vld [vmem:[%s1 + $0x18] sm:$0xff]
  %v37 = vld [vmem:[%s1 + $0x20] sm:$0xff]
  %v38 = vld [vmem:[%s1 + $0x28] sm:$0xff]
  %v39 = vld [vmem:[%s1 + $0x30] sm:$0xff]
  %v40 = vld [vmem:[%s1 + $0x38] sm:$0xff]
  %v41 = vld [vmem:[%s2] sm:$0x1]
  %v43 = vlaneseq
  %v44 = vshrl.u32 %v43, 7
  %v45 = vsub.s32 0, %v44
  %v46 = vrot.slane %v41, %v45
  %vm48 = vcmask 523264
  %v50 = vsel %vm48, %v32, 0
  %52 = vmatprep.subr.mxu0 0.0
  %53 = vmatpush1.msra.mxu0 %v33
  %54 = vmatprep.subr.mxu0 0.0
  %55 = vmatpush1.msra.mxu0 %v34
  %56 = vmatprep.subr.mxu0 0.0
  %57 = vmatpush1.msra.mxu0 %v35
  %58 = vmatprep.subr.mxu0 0.0
  %59 = vmatpush1.msra.mxu0 %v36
  %60 = vmatprep.subr.mxu0 0.0
  %61 = vmatpush1.msra.mxu0 %v37
  %62 = vmatprep.subr.mxu0 0.0
  %63 = vmatpush1.msra.mxu0 %v38
  %64 = vmatprep.subr.mxu0 0.0
  %65 = vmatpush1.msra.mxu0 %v39
  %66 = vmatprep.subr.mxu0 0.0
  %67 = vmatpush1.msra.mxu0 %v40
  %68 = vmatprep.subr.mxu0 0.0
  %69 = vmatpush1.msra.mxu0 0.0
  %70 = vmatprep.subr.mxu0 0.0
  %71 = vmatpush1.msra.mxu0 0.0
  %72 = vmatprep.subr.mxu0 0.0
  %73 = vmatpush1.msra.mxu0 0.0
  %74 = vmatprep.subr.mxu0 0.0
  %75 = vmatpush1.msra.mxu0 0.0
  %76 = vmatprep.subr.mxu0 0.0
  %77 = vmatpush1.msra.mxu0 0.0
  %78 = vmatprep.subr.mxu0 0.0
  %79 = vmatpush1.msra.mxu0 0.0
  %80 = vmatprep.subr.mxu0 0.0
  %81 = vmatpush1.msra.mxu0 0.0
  %82 = vmatprep.subr.mxu0 0.0
  %83 = vmatpush1.msra.mxu0 0.0
  %84 = vmatprep.subr.mxu0 0.0
  %85 = vmatpush1.msra.mxu0 0.0
  %86 = vmatprep.subr.mxu0 0.0
  %87 = vmatpush1.msra.mxu0 0.0
  %88 = vmatprep.subr.mxu0 0.0
  %89 = vmatpush1.msra.mxu0 0.0
  %90 = vmatprep.subr.mxu0 0.0
  %91 = vmatpush1.msra.mxu0 0.0
  %92 = vmatprep.subr.mxu0 0.0
  %93 = vmatpush1.msra.mxu0 0.0
  %94 = vmatprep.subr.mxu0 0.0
  %95 = vmatpush1.msra.mxu0 0.0
  %96 = vmatprep.subr.mxu0 0.0
  %97 = vmatpush1.msra.mxu0 0.0
  %98 = vmatprep.subr.mxu0 0.0
  %99 = vmatpush1.msra.mxu0 0.0
  %100 = vmatprep.subr.mxu0 0.0
  %101 = vmatpush1.msra.mxu0 0.0
  %102 = vmatprep.subr.mxu0 0.0
  %103 = vmatpush1.msra.mxu0 0.0
  %104 = vmatprep.subr.mxu0 0.0
  %105 = vmatpush1.msra.mxu0 0.0
  %106 = vmatprep.subr.mxu0 0.0
  %107 = vmatpush1.msra.mxu0 0.0
  %108 = vmatprep.subr.mxu0 0.0
  %109 = vmatpush1.msra.mxu0 0.0
  %110 = vmatprep.subr.mxu0 0.0
  %111 = vmatpush1.msra.mxu0 0.0
  %112 = vmatprep.subr.mxu0 0.0
  %113 = vmatpush1.msra.mxu0 0.0
  %114 = vmatprep.subr.mxu0 0.0
  %115 = vmatpush1.msra.mxu0 0.0
  %116 = vmatprep.mubr.f32.mxu0 0.0
  %117 = vmatmul.mubr.f32.gmra.mrb[0].mxu0 %v50
  %v118 = vpop.f32.mrb[0].mxu0
  %v119 = vadd.f32 %v46, %v118
  %v120 = vpop.f32.mrb[0].mxu0
  %121 = vdwg.mxu0
  %v122 = vld [vmem:[%s3] sm:$0xff]
  %v123 = vld [vmem:[%s5] sm:$0xff]
  %v124 = vld [vmem:[%s5 + $0x8] sm:$0xff]
  %v125 = vld [vmem:[%s5 + $0x10] sm:$0xff]
  %v126 = vld [vmem:[%s5 + $0x18] sm:$0xff]
  %v127 = vld [vmem:[%s5 + $0x20] sm:$0xff]
  %v128 = vld [vmem:[%s5 + $0x28] sm:$0xff]
  %v129 = vld [vmem:[%s5 + $0x30] sm:$0xff]
  %v130 = vld [vmem:[%s5 + $0x38] sm:$0xff]
  %v131 = vld [vmem:[%s5 + $0x40] sm:$0xff]
  %v132 = vld [vmem:[%s5 + $0x48] sm:$0xff]
  %v133 = vld [vmem:[%s5 + $0x50] sm:$0xff]
  %v134 = vld [vmem:[%s5 + $0x58] sm:$0xff]
  %v135 = vld [vmem:[%s5 + $0x60] sm:$0xff]
  %v136 = vld [vmem:[%s5 + $0x68] sm:$0xff]
  %v137 = vld [vmem:[%s5 + $0x70] sm:$0xff]
  %v138 = vld [vmem:[%s5 + $0x78] sm:$0xff]
  %v139 = vld [vmem:[%s6] sm:$0xff]
  %v140 = vld [vmem:[%s6 + $0x8] sm:$0xff]
  %v141 = vld [vmem:[%s6 + $0x10] sm:$0xff]
  %v142 = vld [vmem:[%s6 + $0x18] sm:$0xff]
  %v143 = vld [vmem:[%s6 + $0x20] sm:$0xff]
  %v144 = vld [vmem:[%s6 + $0x28] sm:$0xff]
  %v145 = vld [vmem:[%s6 + $0x30] sm:$0xff]
  %v146 = vld [vmem:[%s6 + $0x38] sm:$0xff]
  %v147 = vld [vmem:[%s6 + $0x40] sm:$0xff]
  %v148 = vld [vmem:[%s6 + $0x48] sm:$0xff]
  %v149 = vld [vmem:[%s6 + $0x50] sm:$0xff]
  %v150 = vld [vmem:[%s6 + $0x58] sm:$0xff]
  %v151 = vld [vmem:[%s6 + $0x60] sm:$0xff]
  %v152 = vld [vmem:[%s6 + $0x68] sm:$0xff]
  %v153 = vld [vmem:[%s6 + $0x70] sm:$0xff]
  %v154 = vld [vmem:[%s6 + $0x78] sm:$0xff]
  %155 = vmatprep.subr.mxu0 0.0
  %156 = vmatpush1.msra.mxu0 %v139
  %157 = vmatprep.subr.mxu0 0.0
  %158 = vmatpush1.msra.mxu0 %v140
  %159 = vmatprep.subr.mxu0 0.0
  %160 = vmatpush1.msra.mxu0 %v141
  %161 = vmatprep.subr.mxu0 0.0
  %162 = vmatpush1.msra.mxu0 %v142
  %163 = vmatprep.subr.mxu0 0.0
  %164 = vmatpush1.msra.mxu0 %v143
  %165 = vmatprep.subr.mxu0 0.0
  %166 = vmatpush1.msra.mxu0 %v144
  %167 = vmatprep.subr.mxu0 0.0
  %168 = vmatpush1.msra.mxu0 %v145
  %169 = vmatprep.subr.mxu0 0.0
  %170 = vmatpush1.msra.mxu0 %v146
  %171 = vmatprep.subr.mxu0 0.0
  %172 = vmatpush1.msra.mxu0 %v147
  %173 = vmatprep.subr.mxu0 0.0
  %174 = vmatpush1.msra.mxu0 %v148
  %175 = vmatprep.subr.mxu0 0.0
  %176 = vmatpush1.msra.mxu0 %v149
  %177 = vmatprep.subr.mxu0 0.0
  %178 = vmatpush1.msra.mxu0 %v150
  %179 = vmatprep.subr.mxu0 0.0
  %180 = vmatpush1.msra.mxu0 %v151
  %181 = vmatprep.subr.mxu0 0.0
  %182 = vmatpush1.msra.mxu0 %v152
  %183 = vmatprep.subr.mxu0 0.0
  %184 = vmatpush1.msra.mxu0 %v153
  %185 = vmatprep.subr.mxu0 0.0
  %186 = vmatpush1.msra.mxu0 %v154
  %187 = vmatprep.subr.mxu0 0.0
  %188 = vmatpush1.msra.mxu0 0.0
  %189 = vmatprep.subr.mxu0 0.0
  %190 = vmatpush1.msra.mxu0 0.0
  %191 = vmatprep.subr.mxu0 0.0
  %192 = vmatpush1.msra.mxu0 0.0
  %193 = vmatprep.subr.mxu0 0.0
  %194 = vmatpush1.msra.mxu0 0.0
  %195 = vmatprep.subr.mxu0 0.0
  %196 = vmatpush1.msra.mxu0 0.0
  %197 = vmatprep.subr.mxu0 0.0
  %198 = vmatpush1.msra.mxu0 0.0
  %199 = vmatprep.subr.mxu0 0.0
  %200 = vmatpush1.msra.mxu0 0.0
  %201 = vmatprep.subr.mxu0 0.0
  %202 = vmatpush1.msra.mxu0 0.0
  %203 = vmatprep.subr.mxu0 0.0
  %204 = vmatpush1.msra.mxu0 0.0
  %205 = vmatprep.subr.mxu0 0.0
  %206 = vmatpush1.msra.mxu0 0.0
  %207 = vmatprep.subr.mxu0 0.0
  %208 = vmatpush1.msra.mxu0 0.0
  %209 = vmatprep.subr.mxu0 0.0
  %210 = vmatpush1.msra.mxu0 0.0
  %211 = vmatprep.subr.mxu0 0.0
  %212 = vmatpush1.msra.mxu0 0.0
  %213 = vmatprep.subr.mxu0 0.0
  %214 = vmatpush1.msra.mxu0 0.0
  %215 = vmatprep.subr.mxu0 0.0
  %216 = vmatpush1.msra.mxu0 0.0
  %217 = vmatprep.subr.mxu0 0.0
  %218 = vmatpush1.msra.mxu0 0.0
  %219 = vmatprep.mubr.f32.mxu0 0.0
  %220 = vmatmul.mubr.f32.gmra.mrb[0].mxu0 %v119
  %v221 = vpop.f32.mrb[0].mxu0
  %v222 = vadd.f32 0.0, %v221
  %v223 = vpop.f32.mrb[0].mxu0
  %224 = vdwg.mxu0
  %225 = vmatprep.subr.mxu0 0.0
  %226 = vmatpush1.msra.mxu0 %v123
  %227 = vmatprep.subr.mxu0 0.0
  %228 = vmatpush1.msra.mxu0 %v124
  %229 = vmatprep.subr.mxu0 0.0
  %230 = vmatpush1.msra.mxu0 %v125
  %231 = vmatprep.subr.mxu0 0.0
  %232 = vmatpush1.msra.mxu0 %v126
  %233 = vmatprep.subr.mxu0 0.0
  %234 = vmatpush1.msra.mxu0 %v127
  %235 = vmatprep.subr.mxu0 0.0
  %236 = vmatpush1.msra.mxu0 %v128
  %237 = vmatprep.subr.mxu0 0.0
  %238 = vmatpush1.msra.mxu0 %v129
  %239 = vmatprep.subr.mxu0 0.0
  %240 = vmatpush1.msra.mxu0 %v130
  %241 = vmatprep.subr.mxu0 0.0
  %242 = vmatpush1.msra.mxu0 %v131
  %243 = vmatprep.subr.mxu0 0.0
  %244 = vmatpush1.msra.mxu0 %v132
  %245 = vmatprep.subr.mxu0 0.0
  %246 = vmatpush1.msra.mxu0 %v133
  %247 = vmatprep.subr.mxu0 0.0
  %248 = vmatpush1.msra.mxu0 %v134
  %249 = vmatprep.subr.mxu0 0.0
  %250 = vmatpush1.msra.mxu0 %v135
  %251 = vmatprep.subr.mxu0 0.0
  %252 = vmatpush1.msra.mxu0 %v136
  %253 = vmatprep.subr.mxu0 0.0
  %254 = vmatpush1.msra.mxu0 %v137
  %255 = vmatprep.subr.mxu0 0.0
  %256 = vmatpush1.msra.mxu0 %v138
  %257 = vmatprep.subr.mxu0 0.0
  %258 = vmatpush1.msra.mxu0 0.0
  %259 = vmatprep.subr.mxu0 0.0
  %260 = vmatpush1.msra.mxu0 0.0
  %261 = vmatprep.subr.mxu0 0.0
  %262 = vmatpush1.msra.mxu0 0.0
  %263 = vmatprep.subr.mxu0 0.0
  %264 = vmatpush1.msra.mxu0 0.0
  %265 = vmatprep.subr.mxu0 0.0
  %266 = vmatpush1.msra.mxu0 0.0
  %267 = vmatprep.subr.mxu0 0.0
  %268 = vmatpush1.msra.mxu0 0.0
  %269 = vmatprep.subr.mxu0 0.0
  %270 = vmatpush1.msra.mxu0 0.0
  %271 = vmatprep.subr.mxu0 0.0
  %272 = vmatpush1.msra.mxu0 0.0
  %273 = vmatprep.subr.mxu0 0.0
  %274 = vmatpush1.msra.mxu0 0.0
  %275 = vmatprep.subr.mxu0 0.0
  %276 = vmatpush1.msra.mxu0 0.0
  %277 = vmatprep.subr.mxu0 0.0
  %278 = vmatpush1.msra.mxu0 0.0
  %279 = vmatprep.subr.mxu0 0.0
  %280 = vmatpush1.msra.mxu0 0.0
  %281 = vmatprep.subr.mxu0 0.0
  %282 = vmatpush1.msra.mxu0 0.0
  %283 = vmatprep.subr.mxu0 0.0
  %284 = vmatpush1.msra.mxu0 0.0
  %285 = vmatprep.subr.mxu0 0.0
  %286 = vmatpush1.msra.mxu0 0.0
  %287 = vmatprep.subr.mxu0 0.0
  %288 = vmatpush1.msra.mxu0 0.0
  %289 = vmatprep.mubr.f32.mxu0 0.0
  %290 = vmatmul.mubr.f32.gmra.mrb[0].mxu0 %v122
  %v291 = vpop.f32.mrb[0].mxu0
  %v292 = vadd.f32 %v222, %v291
  %v293 = vpop.f32.mrb[0].mxu0
  %294 = vdwg.mxu0
  %v295 = vld [vmem:[%s4] sm:$0xff]
  %v296 = vld [vmem:[%s7] sm:$0xff]
  %v297 = vld [vmem:[%s7 + $0x8] sm:$0xff]
  %v298 = vld [vmem:[%s7 + $0x10] sm:$0xff]
  %v299 = vld [vmem:[%s7 + $0x18] sm:$0xff]
  %v300 = vld [vmem:[%s7 + $0x20] sm:$0xff]
  %v301 = vld [vmem:[%s7 + $0x28] sm:$0xff]
  %v302 = vld [vmem:[%s7 + $0x30] sm:$0xff]
  %v303 = vld [vmem:[%s7 + $0x38] sm:$0xff]
  %v304 = vld [vmem:[%s7 + $0x40] sm:$0xff]
  %v305 = vld [vmem:[%s7 + $0x48] sm:$0xff]
  %v306 = vld [vmem:[%s7 + $0x50] sm:$0xff]
  %v307 = vld [vmem:[%s7 + $0x58] sm:$0xff]
  %v308 = vld [vmem:[%s7 + $0x60] sm:$0xff]
  %v309 = vld [vmem:[%s7 + $0x68] sm:$0xff]
  %v310 = vld [vmem:[%s7 + $0x70] sm:$0xff]
  %v311 = vld [vmem:[%s7 + $0x78] sm:$0xff]
  %312 = vmatprep.subr.mxu0 0.0
  %313 = vmatpush1.msra.mxu0 %v296
  %314 = vmatprep.subr.mxu0 0.0
  %315 = vmatpush1.msra.mxu0 %v297
  %316 = vmatprep.subr.mxu0 0.0
  %317 = vmatpush1.msra.mxu0 %v298
  %318 = vmatprep.subr.mxu0 0.0
  %319 = vmatpush1.msra.mxu0 %v299
  %320 = vmatprep.subr.mxu0 0.0
  %321 = vmatpush1.msra.mxu0 %v300
  %322 = vmatprep.subr.mxu0 0.0
  %323 = vmatpush1.msra.mxu0 %v301
  %324 = vmatprep.subr.mxu0 0.0
  %325 = vmatpush1.msra.mxu0 %v302
  %326 = vmatprep.subr.mxu0 0.0
  %327 = vmatpush1.msra.mxu0 %v303
  %328 = vmatprep.subr.mxu0 0.0
  %329 = vmatpush1.msra.mxu0 %v304
  %330 = vmatprep.subr.mxu0 0.0
  %331 = vmatpush1.msra.mxu0 %v305
  %332 = vmatprep.subr.mxu0 0.0
  %333 = vmatpush1.msra.mxu0 %v306
  %334 = vmatprep.subr.mxu0 0.0
  %335 = vmatpush1.msra.mxu0 %v307
  %336 = vmatprep.subr.mxu0 0.0
  %337 = vmatpush1.msra.mxu0 %v308
  %338 = vmatprep.subr.mxu0 0.0
  %339 = vmatpush1.msra.mxu0 %v309
  %340 = vmatprep.subr.mxu0 0.0
  %341 = vmatpush1.msra.mxu0 %v310
  %342 = vmatprep.subr.mxu0 0.0
  %343 = vmatpush1.msra.mxu0 %v311
  %344 = vmatprep.subr.mxu0 0.0
  %345 = vmatpush1.msra.mxu0 0.0
  %346 = vmatprep.subr.mxu0 0.0
  %347 = vmatpush1.msra.mxu0 0.0
  %348 = vmatprep.subr.mxu0 0.0
  %349 = vmatpush1.msra.mxu0 0.0
  %350 = vmatprep.subr.mxu0 0.0
  %351 = vmatpush1.msra.mxu0 0.0
  %352 = vmatprep.subr.mxu0 0.0
  %353 = vmatpush1.msra.mxu0 0.0
  %354 = vmatprep.subr.mxu0 0.0
  %355 = vmatpush1.msra.mxu0 0.0
  %356 = vmatprep.subr.mxu0 0.0
  %357 = vmatpush1.msra.mxu0 0.0
  %358 = vmatprep.subr.mxu0 0.0
  %359 = vmatpush1.msra.mxu0 0.0
  %360 = vmatprep.subr.mxu0 0.0
  %361 = vmatpush1.msra.mxu0 0.0
  %362 = vmatprep.subr.mxu0 0.0
  %363 = vmatpush1.msra.mxu0 0.0
  %364 = vmatprep.subr.mxu0 0.0
  %365 = vmatpush1.msra.mxu0 0.0
  %366 = vmatprep.subr.mxu0 0.0
  %367 = vmatpush1.msra.mxu0 0.0
  %368 = vmatprep.subr.mxu0 0.0
  %369 = vmatpush1.msra.mxu0 0.0
  %370 = vmatprep.subr.mxu0 0.0
  %371 = vmatpush1.msra.mxu0 0.0
  %372 = vmatprep.subr.mxu0 0.0
  %373 = vmatpush1.msra.mxu0 0.0
  %374 = vmatprep.subr.mxu0 0.0
  %375 = vmatpush1.msra.mxu0 0.0
  %376 = vmatprep.mubr.f32.mxu0 0.0
  %377 = vmatmul.mubr.f32.gmra.mrb[0].mxu0 %v295
  %v378 = vpop.f32.mrb[0].mxu0
  %v379 = vadd.f32 0.0, %v378
  %v380 = vpop.f32.mrb[0].mxu0
  %381 = vdwg.mxu0
  %v382 = vadd.f32 %v292, %v379
  %v383 = vld [vmem:[%s8] sm:$0x1]
  %v385 = vlaneseq
  %v386 = vshrl.u32 %v385, 7
  %v387 = vsub.s32 0, %v386
  %v388 = vrot.slane %v383, %v387
  %v390 = vadd.f32 %v382, %v388
  %v391 = vpack.c.bf16 %v390, %v390
  %392 = vst [vmem:[%s9] sm:$0xf] %v391
  // Predicated region
  $region38: #{qa_bert_tango_forward.2} parent=0 // pred_check
    _
  $region39: #{qa_bert_tango_forward.2} parent=0 // pred_check_branch
    %394 = sbr.rel (0) target = $region41
  $region40: #{qa_bert_tango_forward.2} parent=0 // pred_region
    _
  $region41: #{qa_bert_tango_forward.2} parent=0 // pred_fallthru
    _
  // Predicated region
  $region42: #{qa_bert_tango_forward.2} parent=0 // pred_check
    _
  $region43: #{qa_bert_tango_forward.2} parent=0 // pred_check_branch
    %396 = sbr.rel (0) target = $region45
  $region44: #{qa_bert_tango_forward.2} parent=0 // pred_region
    _
  $region45: #{qa_bert_tango_forward.2} parent=0 // pred_fallthru
    _

// kernel: qa_bert_tango_forward.3
$region0: #{qa_bert_tango_forward.3}
  #allocation0 [shape = 'u32[]', space=smem, size = 0x4, offset = 0x4, fixed_abs, tag = 'smem constant byte address 0x4 - core index']
  #allocation1 [shape = 'u32[144,128]{1,0:T(1,128)}', space=vmem, size = 0x12000, scoped, tag = 'internal scratch']
  #allocation2 [shape = 'f32[1,1]{1,0:T(1,128)}', space=vmem, size = 0x200, scoped, tag = 'scratch operand']
  #allocation3 [shape = 'f32[1,1]{1,0:T(1,128)}', space=vmem, size = 0x200, scoped, tag = 'scratch operand']
  #allocation4 [shape = 'f32[1,1]{1,0:T(1,128)}', space=vmem, size = 0x200, scoped, tag = 'scratch operand']
  #allocation5 [shape = 's32[1]{0}', space=sflag, size = 0x4, scoped, tag = 'scoped memory for qa_bert_tango_forward.3']
  #allocation6 [shape = 'u8[512]{0}', space=smem, size = 0x200, scoped, tag = 'prefetched SMEM operand 0']
  #allocation7 [shape = 'u8[512]{0}', space=smem, size = 0x200, scoped, tag = 'prefetched SMEM operand 1']
  %s0 = inlined_call_operand.vmem [shape: s32[8], index: 0, kind: input, shape index: {}]
  %s1 = inlined_call_operand.vmem [shape: s32[8], index: 1, kind: input, shape index: {}]
  %s2 = inlined_call_operand.vmem [shape: bf16[8,1,128], index: 2, kind: input, shape index: {}]
  %s3 = inlined_call_operand.vmem [shape: bf16[4,128,128], index: 3, kind: input, shape index: {}]
  %s4 = inlined_call_operand.hbm [shape: f32[8,1,128], index: 4, kind: output, shape index: {0}]
  %s5 = inlined_call_operand.vmem [shape: f32[8,1,1], index: 5, kind: output, shape index: {1}]
  %6 = xla_tuple %s4, %s5
  %s7 = sld [smem:[#allocation0]]
  $region57: #{qa_bert_tango_forward.3} parent=0
    _
  %s9 = ssub.s32 1, %s7
  %s10 = scalar_select 0, %s9, %s7
  %s11 = sshll.u32 %s0, 4
  %s12 = int_to_ptr.vmem [resolvable:$true] %s11
  %14 = dma.vmem_to_smem %s12, 16, [#allocation6], [#allocation5]
  %s15 = sshll.u32 %s1, 4
  %s16 = int_to_ptr.vmem [resolvable:$true] %s15
  %18 = dma.vmem_to_smem %s16, 16, [#allocation7], [#allocation5]
  %19 = dma.done [#allocation5], 32
  %20 = sfence
  $region1: #{qa_bert_tango_forward.3} parent=0
    #allocation8 [shape = 'u8[1024]{0}', space=vmem, size = 0x400, scoped, tag = 'output window, operand 0']
    #allocation9 [shape = 's32[2]{0}', space=sflag, size = 0x8, scoped, tag = 'scoped memory for qa_bert_tango_forward.3']
    %21 = vsyncpa [#allocation9], 0
    %s22 = scalar_lea.sflag [#allocation9], 1
    %23 = vsyncpa %s22, 0
    loop: start=0, step=1, limit=10
    $region2: #{qa_bert_tango_forward.3} parent=1 // loop_pre_header
      _
    $region3: #{qa_bert_tango_forward.3} parent=1 // loop_header
      %s25 = sphi 0, %s29
      %p26 = scmp.ge.s32.totalorder %s25, 10
      %s32 = sphi 0, %s44
      %s33 = sphi 0, %s40
      %s34 = sphi 0, %s32
      %s35 = sphi 0, %s33
      %s36 = sphi 0, %s34
      %s37 = sphi 0, %s35
      %s47 = sphi 0, %s49
      %s50 = sphi 0, %s47
      %s51 = sphi 0, %s50
      %s67 = sphi 0, %s51
      %s77 = sphi 0, %s79
      %s80 = sphi 0, %s77
      %s81 = sphi 0, %s80
      %s97 = sphi 0, %s81
      %s105 = sphi 0, %s107
      %s108 = sphi 0, %s105
      %s109 = sphi 0, %s108
      %s125 = sphi 0, %s109
      %s131 = sphi 0, %s133
      %s134 = sphi 0, %s131
      %s135 = sphi 0, %s134
      %s151 = sphi 0, %s135
    $region4: #{qa_bert_tango_forward.3} parent=1 // loop_header_branch
      %28 = sbr.rel (%p26) target = $region8
    $region5: #{qa_bert_tango_forward.3} parent=1 // loop_body
      %s30 = ssub.s32 %s25, 1
      %s31 = ssub.s32 %s25, 2
      %s38 = sadd.s32 1, %s33
      %p39 = scmp.ge.s32.totalorder %s38, 1
      %s40 = scalar_select %p39, 0, %s38
      %s41 = sadd.s32 1, %s32
      %s42 = scalar_select %p39, %s41, %s32
      %p43 = scmp.ge.s32.totalorder %s42, 8
      %s44 = scalar_select %p43, 0, %s42
      %s45 = ssub.s32 %s32, %s44
      %p46 = scmp.eq.s32.totalorder %s45, 0
      %s48 = sadd.s32 %s47, 1
      %s49 = scalar_select %p46, %s47, %s48
      %p52 = pneg %p46
      %p53 = scmp.eq.s32.totalorder %s25, 7
      %p54 = por %p52, %p53
      %p55 = scmp.ne.s32.totalorder %s47, %s50
      %p56 = scmp.eq.s32.totalorder %s25, 0
      %p57 = por %p55, %p56
      %p58 = scmp.ne.s32.totalorder %s47, %s50
      %p59 = scmp.eq.s32.totalorder %s30, 7
      %p60 = por %p58, %p59
      %p61 = scmp.ne.s32.totalorder %s50, %s51
      %p62 = scmp.eq.s32.totalorder %s30, 0
      %p63 = por %p61, %p62
      %p64 = scmp.ne.s32.totalorder %s50, %s51
      %p65 = scmp.eq.s32.totalorder %s31, 7
      %p66 = por %p64, %p65
      %p68 = scmp.ne.s32.totalorder %s51, %s67
      %p69 = scmp.eq.s32.totalorder %s31, 0
      %p70 = por %p68, %p69
      %s71 = sld [smem:[#allocation6 + %s32]]
      %s72 = sld [smem:[#allocation6 + %s44]]
      %s73 = ssub.s32 %s71, %s72
      %s74 = ssub.s32 %s33, %s40
      %s75 = sor.u32 %s73, %s74
      %p76 = scmp.eq.s32.totalorder %s75, 0
      %s78 = sadd.s32 %s77, 1
      %s79 = scalar_select %p76, %s77, %s78
      %p82 = pneg %p76
      %p83 = scmp.eq.s32.totalorder %s25, 7
      %p84 = por %p82, %p83
      %p85 = scmp.ne.s32.totalorder %s77, %s80
      %p86 = scmp.eq.s32.totalorder %s25, 0
      %p87 = por %p85, %p86
      %p88 = scmp.ne.s32.totalorder %s77, %s80
      %p89 = scmp.eq.s32.totalorder %s30, 7
      %p90 = por %p88, %p89
      %p91 = scmp.ne.s32.totalorder %s80, %s81
      %p92 = scmp.eq.s32.totalorder %s30, 0
      %p93 = por %p91, %p92
      %p94 = scmp.ne.s32.totalorder %s80, %s81
      %p95 = scmp.eq.s32.totalorder %s31, 7
      %p96 = por %p94, %p95
      %p98 = scmp.ne.s32.totalorder %s81, %s97
      %p99 = scmp.eq.s32.totalorder %s31, 0
      %p100 = por %p98, %p99
      %s101 = ssub.s32 %s32, %s44
      %s102 = ssub.s32 %s33, %s40
      %s103 = sor.u32 %s101, %s102
      %p104 = scmp.eq.s32.totalorder %s103, 0
      %s106 = sadd.s32 %s105, 1
      %s107 = scalar_select %p104, %s105, %s106
      %p110 = pneg %p104
      %p111 = scmp.eq.s32.totalorder %s25, 7
      %p112 = por %p110, %p111
      %p113 = scmp.ne.s32.totalorder %s105, %s108
      %p114 = scmp.eq.s32.totalorder %s25, 0
      %p115 = por %p113, %p114
      %p116 = scmp.ne.s32.totalorder %s105, %s108
      %p117 = scmp.eq.s32.totalorder %s30, 7
      %p118 = por %p116, %p117
      %p119 = scmp.ne.s32.totalorder %s108, %s109
      %p120 = scmp.eq.s32.totalorder %s30, 0
      %p121 = por %p119, %p120
      %p122 = scmp.ne.s32.totalorder %s108, %s109
      %p123 = scmp.eq.s32.totalorder %s31, 7
      %p124 = por %p122, %p123
      %p126 = scmp.ne.s32.totalorder %s109, %s125
      %p127 = scmp.eq.s32.totalorder %s31, 0
      %p128 = por %p126, %p127
      %s129 = ssub.s32 %s32, %s44
      %p130 = scmp.eq.s32.totalorder %s129, 0
      %s132 = sadd.s32 %s131, 1
      %s133 = scalar_select %p130, %s131, %s132
      %p136 = pneg %p130
      %p137 = scmp.eq.s32.totalorder %s25, 7
      %p138 = por %p136, %p137
      %p139 = scmp.ne.s32.totalorder %s131, %s134
      %p140 = scmp.eq.s32.totalorder %s25, 0
      %p141 = por %p139, %p140
      %p142 = scmp.ne.s32.totalorder %s131, %s134
      %p143 = scmp.eq.s32.totalorder %s30, 7
      %p144 = por %p142, %p143
      %p145 = scmp.ne.s32.totalorder %s134, %s135
      %p146 = scmp.eq.s32.totalorder %s30, 0
      %p147 = por %p145, %p146
      %p148 = scmp.ne.s32.totalorder %s134, %s135
      %p149 = scmp.eq.s32.totalorder %s31, 7
      %p150 = por %p148, %p149
      %p152 = scmp.ne.s32.totalorder %s135, %s151
      %p153 = scmp.eq.s32.totalorder %s31, 0
      %p154 = por %p152, %p153
      %p155 = scmp.le.s32.totalorder 1, %s25
      %p156 = scmp.lt.s32.totalorder %s25, 9
      %p157 = pnand %p155, %p156
      %p158 = pneg %p157
      // Predicated region
      $region9: #{qa_bert_tango_forward.3} parent=5 // pred_check
        _
      $region10: #{qa_bert_tango_forward.3} parent=5 // pred_check_branch
        %160 = sbr.rel (%p157) target = $region12
      $region11: #{qa_bert_tango_forward.3} parent=5 // pred_region
        %s161 = ssub.s32 %s25, 1
      $region12: #{qa_bert_tango_forward.3} parent=5 // pred_fallthru
        _
      %p162 = scmp.lt.s32.totalorder %s25, 8
      // Predicated region
      $region13: #{qa_bert_tango_forward.3} parent=5 // pred_check
        %p163 = pneg %p162
      $region14: #{qa_bert_tango_forward.3} parent=5 // pred_check_branch
        %165 = sbr.rel (%p163) target = $region16
      $region15: #{qa_bert_tango_forward.3} parent=5 // pred_region
        // Predicated region
        $region17: #{qa_bert_tango_forward.3} parent=15 // pred_check
          %p166 = pneg %p57
        $region18: #{qa_bert_tango_forward.3} parent=15 // pred_check_branch
          %168 = sbr.rel (%p166) target = $region20
        $region19: #{qa_bert_tango_forward.3} parent=15 // pred_region
          %p169 = scmp.lt.s32.totalorder %s32, 7
          %s170 = scalar_select %p169, %s32, 7
          %s171 = scalar_lea.vmem %s2, %s170
        $region20: #{qa_bert_tango_forward.3} parent=15 // pred_fallthru
          _
        // Predicated region
        $region21: #{qa_bert_tango_forward.3} parent=15 // pred_check
          %p172 = pneg %p87
        $region22: #{qa_bert_tango_forward.3} parent=15 // pred_check_branch
          %174 = sbr.rel (%p172) target = $region24
        $region23: #{qa_bert_tango_forward.3} parent=15 // pred_region
          %s175 = sld [smem:[#allocation6 + %s32]]
          %s176 = smul.u32 16, %s33
          %p177 = scmp.lt.s32.totalorder %s175, 3
          %s178 = scalar_select %p177, %s175, 3
          %p179 = scmp.lt.s32.totalorder %s176, 15
          %s180 = scalar_select %p179, %s176, 15
          %s181 = smul.addr %s178, 16
          %s182 = sadd.s32 %s180, %s181
          %s183 = smul.addr %s182, 4
          %s184 = scalar_lea.vmem %s3, %s183
          %s185 = sld [smem:[#allocation6 + %s32]]
          %s186 = smul.u32 16, %s33
        $region24: #{qa_bert_tango_forward.3} parent=15 // pred_fallthru
          _
      $region16: #{qa_bert_tango_forward.3} parent=5 // pred_fallthru
        _
      %p187 = scmp.le.s32.totalorder 1, %s25
      %p188 = scmp.lt.s32.totalorder %s25, 9
      %p189 = pnand %p187, %p188
      %p190 = pneg %p189
      // Predicated region
      $region25: #{qa_bert_tango_forward.3} parent=5 // pred_check
        _
      $region26: #{qa_bert_tango_forward.3} parent=5 // pred_check_branch
        %192 = sbr.rel (%p189) target = $region28
      $region27: #{qa_bert_tango_forward.3} parent=5 // pred_region
        %s193 = ssub.s32 %s25, 1
        %p194 = scmp.lt.s32.totalorder %s34, 7
        %s195 = scalar_select %p194, %s34, 7
        %s196 = scalar_lea.vmem %s2, %s195
        %p197 = pneg %p63
        %p198 = pneg %p60
        %s199 = sld [smem:[#allocation6 + %s34]]
        %s200 = smul.u32 16, %s35
        %p201 = scmp.lt.s32.totalorder %s199, 3
        %s202 = scalar_select %p201, %s199, 3
        %p203 = scmp.lt.s32.totalorder %s200, 15
        %s204 = scalar_select %p203, %s200, 15
        %s205 = smul.addr %s202, 16
        %s206 = sadd.s32 %s204, %s205
        %s207 = smul.addr %s206, 4
        %s208 = scalar_lea.vmem %s3, %s207
        %p209 = pneg %p93
        %p210 = pneg %p90
        %p211 = pneg %p121
        %p212 = pneg %p118
        %s213 = sand.u32 %s108, 1
        %s214 = scalar_lea.sflag [#allocation9], %s213
        %s215 = sand.u32 %s108, 1
        %s216 = scalar_lea.vmem [#allocation8], %s215
        %p217 = pneg %p147
        %p218 = pneg %p144
        %p219 = scmp.lt.s32.totalorder %s34, 7
        %s220 = scalar_select %p219, %s34, 7
        %s221 = scalar_lea.vmem %s5, %s220
        %p222 = scmp.lt.s32.totalorder %s34, 7
        %s223 = scalar_select %p222, %s34, 7
        %s224 = scalar_lea.vmem %s2, %s223
        %s225 = sld [smem:[#allocation6 + %s34]]
        %s226 = smul.u32 16, %s35
        %p227 = scmp.lt.s32.totalorder %s225, 3
        %s228 = scalar_select %p227, %s225, 3
        %p229 = scmp.lt.s32.totalorder %s226, 15
        %s230 = scalar_select %p229, %s226, 15
        %s231 = smul.addr %s228, 16
        %s232 = sadd.s32 %s230, %s231
        %s233 = smul.addr %s232, 4
        %s234 = scalar_lea.vmem %s3, %s233
        %s235 = sld [smem:[#allocation6 + %s34]]
        %s236 = smul.u32 16, %s35
        %p237 = scmp.lt.s32.totalorder %s34, 7
        %s238 = scalar_select %p237, %s34, 7
        %s239 = scalar_lea.vmem %s5, %s238
        %p241 = scmp.eq.s32.totalorder %s35, 0
        // Predicated region
        $region29: #{qa_bert_tango_forward.3} parent=27 // pred_check
          %p242 = pneg %p241
        $region30: #{qa_bert_tango_forward.3} parent=27 // pred_check_branch
          %244 = sbr.rel (%p242) target = $region32
        $region31: #{qa_bert_tango_forward.3} parent=27 // pred_region
          %vm245 = vcmask 0
          %246 = vst.msk [vmem:[#allocation2] sm:$0x1] %vm245, -inf
          %247 = vst.msk [vmem:[#allocation3] sm:$0x1] %vm245, 0.0
          %248 = vst.msk [vmem:[#allocation4] sm:$0x1] %vm245, 0.0
        $region32: #{qa_bert_tango_forward.3} parent=27 // pred_fallthru
          _
        %v249 = vld [vmem:[%s224] sm:$0x1]
        %v250 = vld [vmem:[%s234] sm:$0xf]
        %v251 = vld [vmem:[%s234 + $0x4] sm:$0xf]
        %v252 = vld [vmem:[%s234 + $0x8] sm:$0xf]
        %v253 = vld [vmem:[%s234 + $0xc] sm:$0xf]
        %v254 = vld [vmem:[%s234 + $0x10] sm:$0xf]
        %v255 = vld [vmem:[%s234 + $0x14] sm:$0xf]
        %v256 = vld [vmem:[%s234 + $0x18] sm:$0xf]
        %v257 = vld [vmem:[%s234 + $0x1c] sm:$0xf]
        %v258 = vld [vmem:[%s234 + $0x20] sm:$0xf]
        %v259 = vld [vmem:[%s234 + $0x24] sm:$0xf]
        %v260 = vld [vmem:[%s234 + $0x28] sm:$0xf]
        %v261 = vld [vmem:[%s234 + $0x2c] sm:$0xf]
        %v262 = vld [vmem:[%s234 + $0x30] sm:$0xf]
        %v263 = vld [vmem:[%s234 + $0x34] sm:$0xf]
        %v264 = vld [vmem:[%s234 + $0x38] sm:$0xf]
        %v265 = vld [vmem:[%s234 + $0x3c] sm:$0xf]
        %v282 = vunpack.c.l.b16 %v250
        %v283 = vunpack.c.l.b16 %v251
        %v284 = vunpack.c.l.b16 %v252
        %v285 = vunpack.c.l.b16 %v253
        %v286 = vunpack.c.l.b16 %v254
        %v287 = vunpack.c.l.b16 %v255
        %v288 = vunpack.c.l.b16 %v256
        %v289 = vunpack.c.l.b16 %v257
        %v290 = vunpack.c.l.b16 %v258
        %v291 = vunpack.c.l.b16 %v259
        %v292 = vunpack.c.l.b16 %v260
        %v293 = vunpack.c.l.b16 %v261
        %v294 = vunpack.c.l.b16 %v262
        %v295 = vunpack.c.l.b16 %v263
        %v296 = vunpack.c.l.b16 %v264
        %v297 = vunpack.c.l.b16 %v265
        %v298 = vpack.c.b16 %v283, %v282
        %v299 = vpack.c.b16 %v285, %v284
        %v300 = vpack.c.b16 %v287, %v286
        %v301 = vpack.c.b16 %v289, %v288
        %v302 = vpack.c.b16 %v291, %v290
        %v303 = vpack.c.b16 %v293, %v292
        %v304 = vpack.c.b16 %v295, %v294
        %v305 = vpack.c.b16 %v297, %v296
        %314 = vmatprep.subr.bf16.mxu0 0
        %315 = vmatpush1.bf16.xpose.msra.mxu0 %v298
        %316 = vmatprep.subr.bf16.mxu0 0
        %317 = vmatpush1.bf16.xpose.msra.mxu0 %v299
        %318 = vmatprep.subr.bf16.mxu0 0
        %319 = vmatpush1.bf16.xpose.msra.mxu0 %v300
        %320 = vmatprep.subr.bf16.mxu0 0
        %321 = vmatpush1.bf16.xpose.msra.mxu0 %v301
        %322 = vmatprep.subr.bf16.mxu0 0
        %323 = vmatpush1.bf16.xpose.msra.mxu0 %v302
        %324 = vmatprep.subr.bf16.mxu0 0
        %325 = vmatpush1.bf16.xpose.msra.mxu0 %v303
        %326 = vmatprep.subr.bf16.mxu0 0
        %327 = vmatpush1.bf16.xpose.msra.mxu0 %v304
        %328 = vmatprep.subr.bf16.mxu0 0
        %329 = vmatpush1.bf16.xpose.msra.mxu0 %v305
        %330 = vmatprep.subr.bf16.mxu0 0
        %331 = vmatpush1.bf16.xpose.msra.mxu0 0
        %332 = vmatprep.subr.bf16.mxu0 0
        %333 = vmatpush1.bf16.xpose.msra.mxu0 0
        %334 = vmatprep.subr.bf16.mxu0 0
        %335 = vmatpush1.bf16.xpose.msra.mxu0 0
        %336 = vmatprep.subr.bf16.mxu0 0
        %337 = vmatpush1.bf16.xpose.msra.mxu0 0
        %338 = vmatprep.subr.bf16.mxu0 0
        %339 = vmatpush1.bf16.xpose.msra.mxu0 0
        %340 = vmatprep.subr.bf16.mxu0 0
        %341 = vmatpush1.bf16.xpose.msra.mxu0 0
        %342 = vmatprep.subr.bf16.mxu0 0
        %343 = vmatpush1.bf16.xpose.msra.mxu0 0
        %344 = vmatprep.subr.bf16.mxu0 0
        %345 = vmatpush1.bf16.xpose.msra.mxu0 0
        %346 = vmatprep.mubr.bf16.mxu0 0
        %347 = vmatmul.mubr.bf16.gmra.mrb[0].mxu0 %v249
        %v348 = vpop.f32.mrb[0].mxu0
        %v349 = vadd.f32 0.0, %v348
        %v350 = vpop.f32.mrb[0].mxu0
        %v351 = vpop.f32.mrb[0].mxu0
        %v352 = vpop.f32.mrb[0].mxu0
        %353 = vdwg.mxu0
        %v354 = vlaneseq
        %v355 = vand.u32 %v354, 127
        %s356 = smul.u32 %s35, 128
        %v357 = vstv %s356
        %v358 = vadd.s32 %v355, %v357
        %vm359 = vcmp.lt.s32.totalorder %v358, 128
        %v360 = vsel %vm359, %v349, -inf
        %361 = vst [vmem:[%s216] sm:$0x1] %v360
        %vm362 = vcmask 1040384
        %v363 = vsel %vm362, %v360, -inf
        %364 = vmax.xlane.f32.xlu0 %v363
        %v365 = vpop.xlane.xlu0 %364
        %v366 = vld [vmem:[#allocation2] sm:$0x1]
        %v367 = vmax.f32 %v366, %v365
        %v368 = vld [vmem:[#allocation3] sm:$0x1]
        %v369 = vsub.f32 %v366, %v367
        %v370 = vmul.f32 %v369, 1.442695
        %v371 = vpow.pop %v370
        %v372 = vmul.f32 %v368, %v371
        %374 = vset.pattern.permute.xlu0 0
        %375 = vperm.xlu0 %374, %v367
        %v376 = vpop.permute.xlu0 %375
        %v378 = vlaneseq
        %v379 = vshrl.u32 %v378, 7
        %v380 = vsub.s32 0, %v379
        %v381 = vrot.slane %v376, %v380
        %v382 = vsub.f32 %v360, %v381
        %v383 = vmul.f32 %v382, 1.442695
        %v384 = vpow.pop %v383
        %v385 = vsel %vm362, %v384, 0.0
        %386 = vadd.xlane.f32.xlu0 %v385
        %v387 = vpop.xlane.xlu0 %386
        %v388 = vadd.f32 %v372, %v387
        %vm389 = vcmask 0
        %390 = vst.msk [vmem:[#allocation3] sm:$0x1] %vm389, %v388
        %391 = vst.msk [vmem:[#allocation2] sm:$0x1] %vm389, %v367
        %s392 = sld [smem:[#allocation7 + %s34]]
        %v393 = vstv %s392
        %vm394 = vcmp.eq.s32.totalorder %v358, %v393
        %vm395 = vmand %vm394, %vm359
        %v396 = vld [vmem:[#allocation4] sm:$0x1]
        %v397 = vsel %vm395, %v349, 0.0
        %v398 = vsel %vm362, %v397, 0.0
        %399 = vadd.xlane.f32.xlu0 %v398
        %v400 = vpop.xlane.xlu0 %399
        %v401 = vadd.f32 %v396, %v400
        %402 = vst.msk [vmem:[#allocation4] sm:$0x1] %vm389, %v401
        // Predicated region
        $region33: #{qa_bert_tango_forward.3} parent=27 // pred_check
          %p403 = pneg %p241
        $region34: #{qa_bert_tango_forward.3} parent=27 // pred_check_branch
          %405 = sbr.rel (%p403) target = $region36
        $region35: #{qa_bert_tango_forward.3} parent=27 // pred_region
          %v406 = vld [vmem:[#allocation2] sm:$0x1]
          %v407 = vld [vmem:[#allocation3] sm:$0x1]
          %v408 = vlog2.pop %v407
          %v409 = vmul.f32 %v408, 0.6931472
          %v410 = vadd.f32 %v406, %v409
          %v411 = vld [vmem:[#allocation4] sm:$0x1]
          %v412 = vsub.f32 %v410, %v411
          %413 = vst.msk [vmem:[%s239] sm:$0x1] %vm389, %v412
        $region36: #{qa_bert_tango_forward.3} parent=27 // pred_fallthru
          _
        %s414 = sand.u32 %s108, 1
        %s415 = scalar_lea.sflag [#allocation9], %s414
        %s416 = sand.u32 %s108, 1
        %s417 = scalar_lea.vmem [#allocation8], %s416
        %p418 = scmp.lt.s32.totalorder %s34, 7
        %s419 = scalar_select %p418, %s34, 7
        %s420 = scalar_lea.vmem %s5, %s419
        // Predicated region
        $region37: #{qa_bert_tango_forward.3} parent=27 // pred_check
          %p421 = pneg %p118
        $region38: #{qa_bert_tango_forward.3} parent=27 // pred_check_branch
          %423 = sbr.rel (%p421) target = $region40
        $region39: #{qa_bert_tango_forward.3} parent=27 // pred_region
          %s425 = ssub.s32 16, 16
          %426 = vsyncadd %s415, %s425
          %s427 = sadd.s32 %s35, %s34
          %s428 = smul.addr %s427, 16
          %s429 = scalar_lea.hbm %s4, %s428
          %s431 = sshll.u32 %s417, 4
          %s432 = int_to_ptr.vmem [resolvable:$true] %s431
          %434 = dma.vmem_to_hbm [thread:$0]  %s432, 16, %s429, %s415
        $region40: #{qa_bert_tango_forward.3} parent=27 // pred_fallthru
          _
        // Predicated region
        $region41: #{qa_bert_tango_forward.3} parent=27 // pred_check
          %p435 = pneg %p144
        $region42: #{qa_bert_tango_forward.3} parent=27 // pred_check_branch
          %437 = sbr.rel (%p435) target = $region44
        $region43: #{qa_bert_tango_forward.3} parent=27 // pred_region
          _
        $region44: #{qa_bert_tango_forward.3} parent=27 // pred_fallthru
          _
      $region28: #{qa_bert_tango_forward.3} parent=5 // pred_fallthru
        _
      %p438 = scmp.le.s32.totalorder 2, %s25
      // Predicated region
      $region45: #{qa_bert_tango_forward.3} parent=5 // pred_check
        %p439 = pneg %p438
      $region46: #{qa_bert_tango_forward.3} parent=5 // pred_check_branch
        %441 = sbr.rel (%p439) target = $region48
      $region47: #{qa_bert_tango_forward.3} parent=5 // pred_region
        %s442 = ssub.s32 %s25, 2
        // Predicated region
        $region49: #{qa_bert_tango_forward.3} parent=47 // pred_check
          %p443 = pneg %p124
        $region50: #{qa_bert_tango_forward.3} parent=47 // pred_check_branch
          %445 = sbr.rel (%p443) target = $region52
        $region51: #{qa_bert_tango_forward.3} parent=47 // pred_region
          %s446 = sand.u32 %s109, 1
          %s447 = scalar_lea.sflag [#allocation9], %s446
          %s448 = sand.u32 %s109, 1
          %s449 = scalar_lea.vmem [#allocation8], %s448
          %450 = dma.done %s447, 16
        $region52: #{qa_bert_tango_forward.3} parent=47 // pred_fallthru
          _
        // Predicated region
        $region53: #{qa_bert_tango_forward.3} parent=47 // pred_check
          %p451 = pneg %p150
        $region54: #{qa_bert_tango_forward.3} parent=47 // pred_check_branch
          %453 = sbr.rel (%p451) target = $region56
        $region55: #{qa_bert_tango_forward.3} parent=47 // pred_region
          %p454 = scmp.lt.s32.totalorder %s36, 7
          %s455 = scalar_select %p454, %s36, 7
          %s456 = scalar_lea.vmem %s5, %s455
        $region56: #{qa_bert_tango_forward.3} parent=47 // pred_fallthru
          _
      $region48: #{qa_bert_tango_forward.3} parent=5 // pred_fallthru
        _
    $region6: #{qa_bert_tango_forward.3} parent=1 // loop_footer
      %s29 = sadd.s32 1, %s25
    $region7: #{qa_bert_tango_forward.3} parent=1 // loop_footer_branch
      %24 = sbr.rel target = $region3
    $region8: #{qa_bert_tango_forward.3} parent=1 // loop_exit
      _
    %457 = vsyncpa [#allocation9], 1
    %s458 = scalar_lea.sflag [#allocation9], 1
    %459 = vsyncpa %s458, 1

</llo_original>
